<compile_context>
chip_gen: v7x
topology: tpu7x:2x2x1
jax: 0.10.0
libtpu: 0.0.40
codegen_flags: <defaults>
</compile_context>

<pallas_src>
import functools

import jax
import jax.numpy as jnp
from jax.experimental import pallas as pl
from jax.experimental.pallas import tpu as pltpu


def _round_up(x, m):
    return ((x + m - 1) // m) * m


def _cdiv(a, b):
    return -(-a // b)


def _vmem_budget_bytes():
    """Per-generation VMEM budget: ~40 MiB on v7x (64 MiB/TC), ~80 MiB on v5e/v6e."""
    cap = 64 * 1024 * 1024  # conservative fallback (v7x-sized physical VMEM)
    try:
        info = pltpu.get_tpu_info()
        for attr in ("vmem_capacity_bytes", "vmem_bytes"):
            v = getattr(info, attr, None)
            if v:
                cap = int(v)
                break
    except Exception:
        pass
    return min((cap * 5) // 8, 96 * 1024 * 1024)


def _pick_row_tile(n, cin, cout4, h, wp, itemsize, budget, min_grid_steps=4):
    """Largest output-row tile TH whose double-buffered blocks fit the VMEM budget,
    while keeping >= min_grid_steps grid steps (dual-TC / megacore occupancy)."""
    usable = int(budget * 0.7)  # headroom for compiler-internal scratch

    def block_bytes(th):
        l_in = _round_up((th + 2) * wp + 2, 128)
        tm = th * wp
        return (2 * cin * l_in * itemsize        # halo'd input tile, double-buffered
                + 2 * cout4 * tm * itemsize      # output tile, double-buffered
                + 9 * cout4 * cin * itemsize)    # resident weights

    n_rt_min = max(1, _cdiv(min_grid_steps, n))
    th = max(1, min(h, _cdiv(h, n_rt_min)))
    while th > 1 and block_bytes(th) > usable:
        th -= 1
    return th, _cdiv(h, th)


def _fused_conv_kernel(x_ref, w_ref, o_ref, *, wp, tm):
    """Fused im2col + 3x3 conv for one halo'd row tile.

    x_ref: (Cin, L_in)      compute dtype -- flattened (TH+2 rows, W+2 cols) tile
    w_ref: (9, Cout4, Cin)  compute dtype -- per-tap weights, k = dy*3+dx (resident)
    o_ref: (Cout4, TM)      compute dtype -- conv out, TM = TH*(W+2) flat positions
    """
    acc = None
    for k in range(9):                              # static, unrolled
        dy, dx = divmod(k, 3)
        off = dy * wp + dx
        tap = x_ref[:, pl.ds(off, tm)]              # static lane-offset slice (XLU)
        part = jnp.dot(w_ref[k], tap, preferred_element_type=jnp.float32)
        acc = part if acc is None else acc + part
    o_ref[...] = acc.astype(o_ref.dtype)


def _fused_conv3x3(xtiles, w_taps, *, wp, tm, vmem_limit):
    """xtiles: (G, Cin, L_in); w_taps: (9, Cout4, Cin)  ->  (G, Cout4, TM)."""
    g, cin, l_in = xtiles.shape
    _, cout4, _ = w_taps.shape
    itemsize = jnp.dtype(xtiles.dtype).itemsize

    cost = pl.CostEstimate(
        flops=2 * g * 9 * cout4 * cin * tm,
        transcendentals=0,
        bytes_accessed=(xtiles.size * itemsize
                        + w_taps.size * itemsize
                        + g * cout4 * tm * itemsize),
    )

    kernel = functools.partial(_fused_conv_kernel, wp=wp, tm=tm)
    return pl.pallas_call(
        kernel,
        out_shape=jax.ShapeDtypeStruct((g, cout4, tm), xtiles.dtype),
        grid_spec=pltpu.PrefetchScalarGridSpec(
            num_scalar_prefetch=0,
            grid=(g,),
            in_specs=[
                pl.BlockSpec((None, cin, l_in), lambda i: (i, 0, 0)),
                pl.BlockSpec((9, cout4, cin), lambda i: (0, 0, 0)),  # stays resident
            ],
            out_specs=pl.BlockSpec((None, cout4, tm), lambda i: (i, 0, 0)),
        ),
        compiler_params=pltpu.CompilerParams(
            dimension_semantics=("parallel",),
            vmem_limit_bytes=vmem_limit,
        ),
        cost_estimate=cost,
    )(xtiles, w_taps)


@functools.partial(jax.jit, static_argnames=("upscale", "compute_dtype"))
def pixel_deconv(x_nchw, w_oihw, upscale=2, compute_dtype=jnp.bfloat16):
    """Forward of PixelDeConv. x: (N, Cin, H, W); w: (Cout*r*r, Cin, 3, 3)."""
    N, Cin, H, W = x_nchw.shape
    O = w_oihw.shape[0]                          # = Cout * r * r
    r = upscale
    Cout = O // (r * r)
    Wp = W + 2
    itemsize = jnp.dtype(compute_dtype).itemsize

    budget = _vmem_budget_bytes()
    th, n_rt = _pick_row_tile(N, Cin, O, H, Wp, itemsize, budget)
    hpad = th * n_rt
    tm = th * Wp                                 # output lane width per tile
    l_in = _round_up((th + 2) * Wp + 2, 128)     # halo'd input lane width

    # ReflectionPad2d(1) in NCHW, bf16 operands for the MXU.  Flatten spatial
    # (contiguous, fuses with the pad) and zero-pad the tail so every halo'd
    # row-tile slice below stays in bounds (garbage wrap columns/rows are
    # computed but cropped after the kernel).
    xpad = jnp.pad(x_nchw.astype(compute_dtype),
                   ((0, 0), (0, 0), (1, 1), (1, 1)), mode="reflect")
    xflat = xpad.reshape(N, Cin, (H + 2) * Wp)
    tail = (n_rt - 1) * tm + l_in - (H + 2) * Wp
    if tail > 0:
        xflat = jnp.pad(xflat, ((0, 0), (0, 0), (0, tail)))

    # Halo'd row tiles (~(TH+2)/TH input inflation, replaces the old 9x im2col);
    # batch is flattened into the tile axis -> one 1-D "parallel" grid.
    xtiles = jnp.stack([xflat[:, :, t * tm: t * tm + l_in] for t in range(n_rt)],
                       axis=1).reshape(N * n_rt, Cin, l_in)

    # OIHW -> (9, Cout4, Cin), tap index k = dy*3 + dx (matches kernel offsets).
    w_taps = jnp.transpose(w_oihw, (2, 3, 0, 1)).reshape(9, O, Cin).astype(compute_dtype)

    # Hot path: fused im2col + 3x3 conv (bf16 out, f32 accumulation inside).
    y = _fused_conv3x3(xtiles, w_taps, wp=Wp, tm=tm, vmem_limit=budget)  # (G, O, TM)

    # Stitch row tiles, drop the 2 garbage wrap columns and any padded rows,
    # then PixelShuffle(r) -- all in bf16, single f32 cast at the very end.
    y = y.reshape(N, n_rt, O, th, Wp)
    y = jnp.transpose(y, (0, 2, 1, 3, 4)).reshape(N, O, hpad, Wp)[:, :, :H, :W]
    y = y.reshape(N, Cout, r, r, H, W)
    y = jnp.transpose(y, (0, 1, 4, 2, 5, 3)).reshape(N, Cout, H * r, W * r)
    return y.astype(jnp.float32)


def _reference(x_nchw, w_oihw, upscale=2):
    """Pure-JAX f32 reference (lax.conv) for correctness check."""
    N, Cin, H, W = x_nchw.shape
    O = w_oihw.shape[0]
    r = upscale
    Cout = O // (r * r)
    xp = jnp.pad(x_nchw, ((0, 0), (0, 0), (1, 1), (1, 1)), mode="reflect")
    y = jax.lax.conv_general_dilated(
        xp, w_oihw, window_strides=(1, 1), padding="VALID",
        dimension_numbers=("NCHW", "OIHW", "NCHW"))
    y = y.reshape(N, Cout, r, r, H, W)
    y = jnp.transpose(y, (0, 1, 4, 2, 5, 3))
    return y.reshape(N, Cout, H * r, W * r)


if __name__ == "__main__":
    key = jax.random.PRNGKey(0)
    k_x, k_w = jax.random.split(key)

    N, Cin, Cout, H, W = 2, 4, 4, 16, 16
    x = jax.random.normal(k_x, (N, Cin, H, W), dtype=jnp.float32)
    # Conv2d(in_channels=Cin, out_channels=Cout*4, kernel_size=3, bias=False)
    w = jax.random.normal(k_w, (Cout * 4, Cin, 3, 3), dtype=jnp.float32) * 0.1

    out = jax.block_until_ready(pixel_deconv(x, w))
    assert out.shape == (N, Cout, 2 * H, 2 * W), out.shape
    assert out.dtype == jnp.float32

    ref = jax.block_until_ready(_reference(x, w))
    # bf16 MXU operands + bf16 kernel output (f32 accumulation) -> loosened tol.
    err = float(jnp.max(jnp.abs(out - ref)))
    assert jnp.allclose(out, ref, atol=3e-2, rtol=3e-2), err

    print("KERNEL_OK")
</pallas_src>

<mosaic_0001>
module attributes {stable_mosaic.version = 11 : i64} {
  func.func @_fused_conv_kernel(%arg0: i32, %arg1: memref<1x4x256xbf16, #tpu.memory_space<vmem>>, %arg2: memref<9x16x4xbf16, #tpu.memory_space<vmem>>, %arg3: memref<1x16x144xbf16, #tpu.memory_space<vmem>>) attributes {dimension_semantics = [#tpu.dimension_semantics<parallel>], iteration_bounds = array<i64: 4>, scalar_prefetch = 0 : i64, scratch_operands = 0 : i64, tpu.core_type = #tpu.core_type<tc>, window_params = [{transform_indices = @transform_0, window_bounds = array<i64: 1, 4, 256>}, {pipeline_mode = #tpu.pipeline_mode<synchronous>, transform_indices = @transform_1, window_bounds = array<i64: 9, 16, 4>}, {transform_indices = @transform_2, window_bounds = array<i64: 1, 16, 144>}]} {
    %c0 = arith.constant 0 : index
    %c0_0 = arith.constant 0 : index
    %c0_1 = arith.constant 0 : index
    %0 = vector.load %arg1[%c0, %c0_0, %c0_1] : memref<1x4x256xbf16, #tpu.memory_space<vmem>>, vector<1x4x144xbf16>
    %1 = vector.shape_cast %0 : vector<1x4x144xbf16> to vector<4x144xbf16>
    %c0_2 = arith.constant 0 : index
    %c0_3 = arith.constant 0 : index
    %c0_4 = arith.constant 0 : index
    %2 = vector.load %arg2[%c0_2, %c0_3, %c0_4] : memref<9x16x4xbf16, #tpu.memory_space<vmem>>, vector<1x16x4xbf16>
    %3 = vector.shape_cast %2 : vector<1x16x4xbf16> to vector<16x4xbf16>
    %cst = arith.constant dense<0.000000e+00> : vector<16x144xf32>
    %4 = tpu.matmul %3, %1, %cst {dimension_numbers = #tpu.dot_dimension_numbers<[1], [0], [0], [1], [0, 0, 1, 1], [], []>} : vector<16x4xbf16>, vector<4x144xbf16>, vector<16x144xf32> -> vector<16x144xf32>
    %c0_5 = arith.constant 0 : index
    %c0_6 = arith.constant 0 : index
    %c1 = arith.constant 1 : index
    %5 = vector.load %arg1[%c0_5, %c0_6, %c1] : memref<1x4x256xbf16, #tpu.memory_space<vmem>>, vector<1x4x144xbf16>
    %6 = vector.shape_cast %5 : vector<1x4x144xbf16> to vector<4x144xbf16>
    %c1_7 = arith.constant 1 : index
    %c0_8 = arith.constant 0 : index
    %c0_9 = arith.constant 0 : index
    %7 = vector.load %arg2[%c1_7, %c0_8, %c0_9] : memref<9x16x4xbf16, #tpu.memory_space<vmem>>, vector<1x16x4xbf16>
    %8 = vector.shape_cast %7 : vector<1x16x4xbf16> to vector<16x4xbf16>
    %cst_10 = arith.constant dense<0.000000e+00> : vector<16x144xf32>
    %9 = tpu.matmul %8, %6, %cst_10 {dimension_numbers = #tpu.dot_dimension_numbers<[1], [0], [0], [1], [0, 0, 1, 1], [], []>} : vector<16x4xbf16>, vector<4x144xbf16>, vector<16x144xf32> -> vector<16x144xf32>
    %10 = arith.addf %4, %9 : vector<16x144xf32>
    %c0_11 = arith.constant 0 : index
    %c0_12 = arith.constant 0 : index
    %c2 = arith.constant 2 : index
    %11 = vector.load %arg1[%c0_11, %c0_12, %c2] : memref<1x4x256xbf16, #tpu.memory_space<vmem>>, vector<1x4x144xbf16>
    %12 = vector.shape_cast %11 : vector<1x4x144xbf16> to vector<4x144xbf16>
    %c2_13 = arith.constant 2 : index
    %c0_14 = arith.constant 0 : index
    %c0_15 = arith.constant 0 : index
    %13 = vector.load %arg2[%c2_13, %c0_14, %c0_15] : memref<9x16x4xbf16, #tpu.memory_space<vmem>>, vector<1x16x4xbf16>
    %14 = vector.shape_cast %13 : vector<1x16x4xbf16> to vector<16x4xbf16>
    %cst_16 = arith.constant dense<0.000000e+00> : vector<16x144xf32>
    %15 = tpu.matmul %14, %12, %cst_16 {dimension_numbers = #tpu.dot_dimension_numbers<[1], [0], [0], [1], [0, 0, 1, 1], [], []>} : vector<16x4xbf16>, vector<4x144xbf16>, vector<16x144xf32> -> vector<16x144xf32>
    %16 = arith.addf %10, %15 : vector<16x144xf32>
    %c0_17 = arith.constant 0 : index
    %c0_18 = arith.constant 0 : index
    %c18 = arith.constant 18 : index
    %17 = vector.load %arg1[%c0_17, %c0_18, %c18] : memref<1x4x256xbf16, #tpu.memory_space<vmem>>, vector<1x4x144xbf16>
    %18 = vector.shape_cast %17 : vector<1x4x144xbf16> to vector<4x144xbf16>
    %c3 = arith.constant 3 : index
    %c0_19 = arith.constant 0 : index
    %c0_20 = arith.constant 0 : index
    %19 = vector.load %arg2[%c3, %c0_19, %c0_20] : memref<9x16x4xbf16, #tpu.memory_space<vmem>>, vector<1x16x4xbf16>
    %20 = vector.shape_cast %19 : vector<1x16x4xbf16> to vector<16x4xbf16>
    %cst_21 = arith.constant dense<0.000000e+00> : vector<16x144xf32>
    %21 = tpu.matmul %20, %18, %cst_21 {dimension_numbers = #tpu.dot_dimension_numbers<[1], [0], [0], [1], [0, 0, 1, 1], [], []>} : vector<16x4xbf16>, vector<4x144xbf16>, vector<16x144xf32> -> vector<16x144xf32>
    %22 = arith.addf %16, %21 : vector<16x144xf32>
    %c0_22 = arith.constant 0 : index
    %c0_23 = arith.constant 0 : index
    %c19 = arith.constant 19 : index
    %23 = vector.load %arg1[%c0_22, %c0_23, %c19] : memref<1x4x256xbf16, #tpu.memory_space<vmem>>, vector<1x4x144xbf16>
    %24 = vector.shape_cast %23 : vector<1x4x144xbf16> to vector<4x144xbf16>
    %c4 = arith.constant 4 : index
    %c0_24 = arith.constant 0 : index
    %c0_25 = arith.constant 0 : index
    %25 = vector.load %arg2[%c4, %c0_24, %c0_25] : memref<9x16x4xbf16, #tpu.memory_space<vmem>>, vector<1x16x4xbf16>
    %26 = vector.shape_cast %25 : vector<1x16x4xbf16> to vector<16x4xbf16>
    %cst_26 = arith.constant dense<0.000000e+00> : vector<16x144xf32>
    %27 = tpu.matmul %26, %24, %cst_26 {dimension_numbers = #tpu.dot_dimension_numbers<[1], [0], [0], [1], [0, 0, 1, 1], [], []>} : vector<16x4xbf16>, vector<4x144xbf16>, vector<16x144xf32> -> vector<16x144xf32>
    %28 = arith.addf %22, %27 : vector<16x144xf32>
    %c0_27 = arith.constant 0 : index
    %c0_28 = arith.constant 0 : index
    %c20 = arith.constant 20 : index
    %29 = vector.load %arg1[%c0_27, %c0_28, %c20] : memref<1x4x256xbf16, #tpu.memory_space<vmem>>, vector<1x4x144xbf16>
    %30 = vector.shape_cast %29 : vector<1x4x144xbf16> to vector<4x144xbf16>
    %c5 = arith.constant 5 : index
    %c0_29 = arith.constant 0 : index
    %c0_30 = arith.constant 0 : index
    %31 = vector.load %arg2[%c5, %c0_29, %c0_30] : memref<9x16x4xbf16, #tpu.memory_space<vmem>>, vector<1x16x4xbf16>
    %32 = vector.shape_cast %31 : vector<1x16x4xbf16> to vector<16x4xbf16>
    %cst_31 = arith.constant dense<0.000000e+00> : vector<16x144xf32>
    %33 = tpu.matmul %32, %30, %cst_31 {dimension_numbers = #tpu.dot_dimension_numbers<[1], [0], [0], [1], [0, 0, 1, 1], [], []>} : vector<16x4xbf16>, vector<4x144xbf16>, vector<16x144xf32> -> vector<16x144xf32>
    %34 = arith.addf %28, %33 : vector<16x144xf32>
    %c0_32 = arith.constant 0 : index
    %c0_33 = arith.constant 0 : index
    %c36 = arith.constant 36 : index
    %35 = vector.load %arg1[%c0_32, %c0_33, %c36] : memref<1x4x256xbf16, #tpu.memory_space<vmem>>, vector<1x4x144xbf16>
    %36 = vector.shape_cast %35 : vector<1x4x144xbf16> to vector<4x144xbf16>
    %c6 = arith.constant 6 : index
    %c0_34 = arith.constant 0 : index
    %c0_35 = arith.constant 0 : index
    %37 = vector.load %arg2[%c6, %c0_34, %c0_35] : memref<9x16x4xbf16, #tpu.memory_space<vmem>>, vector<1x16x4xbf16>
    %38 = vector.shape_cast %37 : vector<1x16x4xbf16> to vector<16x4xbf16>
    %cst_36 = arith.constant dense<0.000000e+00> : vector<16x144xf32>
    %39 = tpu.matmul %38, %36, %cst_36 {dimension_numbers = #tpu.dot_dimension_numbers<[1], [0], [0], [1], [0, 0, 1, 1], [], []>} : vector<16x4xbf16>, vector<4x144xbf16>, vector<16x144xf32> -> vector<16x144xf32>
    %40 = arith.addf %34, %39 : vector<16x144xf32>
    %c0_37 = arith.constant 0 : index
    %c0_38 = arith.constant 0 : index
    %c37 = arith.constant 37 : index
    %41 = vector.load %arg1[%c0_37, %c0_38, %c37] : memref<1x4x256xbf16, #tpu.memory_space<vmem>>, vector<1x4x144xbf16>
    %42 = vector.shape_cast %41 : vector<1x4x144xbf16> to vector<4x144xbf16>
    %c7 = arith.constant 7 : index
    %c0_39 = arith.constant 0 : index
    %c0_40 = arith.constant 0 : index
    %43 = vector.load %arg2[%c7, %c0_39, %c0_40] : memref<9x16x4xbf16, #tpu.memory_space<vmem>>, vector<1x16x4xbf16>
    %44 = vector.shape_cast %43 : vector<1x16x4xbf16> to vector<16x4xbf16>
    %cst_41 = arith.constant dense<0.000000e+00> : vector<16x144xf32>
    %45 = tpu.matmul %44, %42, %cst_41 {dimension_numbers = #tpu.dot_dimension_numbers<[1], [0], [0], [1], [0, 0, 1, 1], [], []>} : vector<16x4xbf16>, vector<4x144xbf16>, vector<16x144xf32> -> vector<16x144xf32>
    %46 = arith.addf %40, %45 : vector<16x144xf32>
    %c0_42 = arith.constant 0 : index
    %c0_43 = arith.constant 0 : index
    %c38 = arith.constant 38 : index
    %47 = vector.load %arg1[%c0_42, %c0_43, %c38] : memref<1x4x256xbf16, #tpu.memory_space<vmem>>, vector<1x4x144xbf16>
    %48 = vector.shape_cast %47 : vector<1x4x144xbf16> to vector<4x144xbf16>
    %c8 = arith.constant 8 : index
    %c0_44 = arith.constant 0 : index
    %c0_45 = arith.constant 0 : index
    %49 = vector.load %arg2[%c8, %c0_44, %c0_45] : memref<9x16x4xbf16, #tpu.memory_space<vmem>>, vector<1x16x4xbf16>
    %50 = vector.shape_cast %49 : vector<1x16x4xbf16> to vector<16x4xbf16>
    %cst_46 = arith.constant dense<0.000000e+00> : vector<16x144xf32>
    %51 = tpu.matmul %50, %48, %cst_46 {dimension_numbers = #tpu.dot_dimension_numbers<[1], [0], [0], [1], [0, 0, 1, 1], [], []>} : vector<16x4xbf16>, vector<4x144xbf16>, vector<16x144xf32> -> vector<16x144xf32>
    %52 = arith.addf %46, %51 : vector<16x144xf32>
    %53 = arith.truncf %52 : vector<16x144xf32> to vector<16x144xbf16>
    %c0_47 = arith.constant 0 : index
    %c0_48 = arith.constant 0 : index
    %c0_49 = arith.constant 0 : index
    %54 = vector.load %arg3[%c0_47, %c0_48, %c0_49] : memref<1x16x144xbf16, #tpu.memory_space<vmem>>, vector<1x16x144xbf16>
    %55 = vector.shape_cast %54 : vector<1x16x144xbf16> to vector<16x144xbf16>
    %56 = vector.shape_cast %53 : vector<16x144xbf16> to vector<1x16x144xbf16>
    tpu.vector_store %arg3[%c0_47, %c0_48, %c0_49], %56 {strides = array<i32>} : memref<1x16x144xbf16, #tpu.memory_space<vmem>>, vector<1x16x144xbf16>,
    return
  }
  func.func @transform_0(%arg0: i32) -> (i32, i32, i32) {
    %c0_i32 = arith.constant 0 : i32
    %c0_i32_0 = arith.constant 0 : i32
    %c0_i32_1 = arith.constant 0 : i32
    return %arg0, %c0_i32, %c0_i32_0 : i32, i32, i32
  }
  func.func @transform_1(%arg0: i32) -> (i32, i32, i32) {
    %c0_i32 = arith.constant 0 : i32
    %c0_i32_0 = arith.constant 0 : i32
    %c0_i32_1 = arith.constant 0 : i32
    %c0_i32_2 = arith.constant 0 : i32
    return %c0_i32, %c0_i32_0, %c0_i32_1 : i32, i32, i32
  }
  func.func @transform_2(%arg0: i32) -> (i32, i32, i32) {
    %c0_i32 = arith.constant 0 : i32
    %c0_i32_0 = arith.constant 0 : i32
    %c0_i32_1 = arith.constant 0 : i32
    return %arg0, %c0_i32, %c0_i32_0 : i32, i32, i32
  }
}

</mosaic_0001>

<llo_original>
// kernel: pixel_deconv.1
$region0: #{pixel_deconv.1}
  #allocation0 [shape = 'u32[]', space=smem, size = 0x4, offset = 0x4, fixed_abs, tag = 'smem constant byte address 0x4 - core index']
  #allocation1 [shape = 'u32[144,128]{1,0:T(1,128)}', space=vmem, size = 0x12000, scoped, tag = 'internal scratch']
  %s0 = inlined_call_operand.vmem [shape: bf16[4,4,256], index: 0, kind: input, shape index: {}]
  %s1 = inlined_call_operand.vmem [shape: bf16[9,16,4], index: 1, kind: input, shape index: {}]
  %s2 = inlined_call_operand.vmem [shape: bf16[4,16,144], index: 2, kind: output, shape index: {}]
  %s3 = sld [smem:[#allocation0]]
  $region41: #{pixel_deconv.1} parent=0
    _
  %s5 = ssub.s32 1, %s3
  %s6 = scalar_select 0, %s5, %s3
  loop: start=0, step=1, limit=6
  $region2: #{pixel_deconv.1} parent=0 // loop_pre_header
    _
  $region3: #{pixel_deconv.1} parent=0 // loop_header
    %s8 = sphi 0, %s12
    %p9 = scmp.ge.s32.totalorder %s8, 6
    %s18 = sphi 0, %s20
    %s21 = sphi 0, %s18
    %s22 = sphi 0, %s21
    %s38 = sphi 0, %s22
    %s42 = sphi 0, %s42
    %s44 = sphi 0, %s42
    %s45 = sphi 0, %s44
    %s59 = sphi 0, %s45
    %s65 = sphi 0, %s67
    %s68 = sphi 0, %s65
    %s69 = sphi 0, %s68
    %s85 = sphi 0, %s69
  $region4: #{pixel_deconv.1} parent=0 // loop_header_branch
    %11 = sbr.rel (%p9) target = $region8
  $region5: #{pixel_deconv.1} parent=0 // loop_body
    %s13 = ssub.s32 %s8, 1
    %s14 = ssub.s32 %s8, 2
    %s15 = sadd.s32 %s8, 1
    %s16 = ssub.s32 %s8, %s15
    %p17 = scmp.eq.s32.totalorder %s16, 0
    %s19 = sadd.s32 %s18, 1
    %s20 = scalar_select %p17, %s18, %s19
    %p23 = pneg %p17
    %p24 = scmp.eq.s32.totalorder %s8, 3
    %p25 = por %p23, %p24
    %p26 = scmp.ne.s32.totalorder %s18, %s21
    %p27 = scmp.eq.s32.totalorder %s8, 0
    %p28 = por %p26, %p27
    %p29 = scmp.ne.s32.totalorder %s18, %s21
    %p30 = scmp.eq.s32.totalorder %s13, 3
    %p31 = por %p29, %p30
    %p32 = scmp.ne.s32.totalorder %s21, %s22
    %p33 = scmp.eq.s32.totalorder %s13, 0
    %p34 = por %p32, %p33
    %p35 = scmp.ne.s32.totalorder %s21, %s22
    %p36 = scmp.eq.s32.totalorder %s14, 3
    %p37 = por %p35, %p36
    %p39 = scmp.ne.s32.totalorder %s22, %s38
    %p40 = scmp.eq.s32.totalorder %s14, 0
    %p41 = por %p39, %p40
    %s43 = sadd.s32 %s42, 1
    %p46 = scmp.eq.s32.totalorder %s8, 3
    %p47 = scmp.ne.s32.totalorder %s42, %s44
    %p48 = scmp.eq.s32.totalorder %s8, 0
    %p49 = por %p47, %p48
    %p50 = scmp.ne.s32.totalorder %s42, %s44
    %p51 = scmp.eq.s32.totalorder %s13, 3
    %p52 = por %p50, %p51
    %p53 = scmp.ne.s32.totalorder %s44, %s45
    %p54 = scmp.eq.s32.totalorder %s13, 0
    %p55 = por %p53, %p54
    %p56 = scmp.ne.s32.totalorder %s44, %s45
    %p57 = scmp.eq.s32.totalorder %s14, 3
    %p58 = por %p56, %p57
    %p60 = scmp.ne.s32.totalorder %s45, %s59
    %p61 = scmp.eq.s32.totalorder %s14, 0
    %p62 = por %p60, %p61
    %s63 = ssub.s32 %s8, %s15
    %p64 = scmp.eq.s32.totalorder %s63, 0
    %s66 = sadd.s32 %s65, 1
    %s67 = scalar_select %p64, %s65, %s66
    %p70 = pneg %p64
    %p71 = scmp.eq.s32.totalorder %s8, 3
    %p72 = por %p70, %p71
    %p73 = scmp.ne.s32.totalorder %s65, %s68
    %p74 = scmp.eq.s32.totalorder %s8, 0
    %p75 = por %p73, %p74
    %p76 = scmp.ne.s32.totalorder %s65, %s68
    %p77 = scmp.eq.s32.totalorder %s13, 3
    %p78 = por %p76, %p77
    %p79 = scmp.ne.s32.totalorder %s68, %s69
    %p80 = scmp.eq.s32.totalorder %s13, 0
    %p81 = por %p79, %p80
    %p82 = scmp.ne.s32.totalorder %s68, %s69
    %p83 = scmp.eq.s32.totalorder %s14, 3
    %p84 = por %p82, %p83
    %p86 = scmp.ne.s32.totalorder %s69, %s85
    %p87 = scmp.eq.s32.totalorder %s14, 0
    %p88 = por %p86, %p87
    %p89 = scmp.le.s32.totalorder 1, %s8
    %p90 = scmp.lt.s32.totalorder %s8, 5
    %p91 = pnand %p89, %p90
    %p92 = pneg %p91
    // Predicated region
    $region9: #{pixel_deconv.1} parent=5 // pred_check
      _
    $region10: #{pixel_deconv.1} parent=5 // pred_check_branch
      %94 = sbr.rel (%p91) target = $region12
    $region11: #{pixel_deconv.1} parent=5 // pred_region
      %s95 = ssub.s32 %s8, 1
      // Predicated region
      $region13: #{pixel_deconv.1} parent=11 // pred_check
        %p96 = pneg %p55
      $region14: #{pixel_deconv.1} parent=11 // pred_check_branch
        %98 = sbr.rel (%p96) target = $region16
      $region15: #{pixel_deconv.1} parent=11 // pred_region
        _
      $region16: #{pixel_deconv.1} parent=11 // pred_fallthru
        _
    $region12: #{pixel_deconv.1} parent=5 // pred_fallthru
      _
    %p99 = scmp.lt.s32.totalorder %s8, 4
    // Predicated region
    $region17: #{pixel_deconv.1} parent=5 // pred_check
      %p100 = pneg %p99
    $region18: #{pixel_deconv.1} parent=5 // pred_check_branch
      %102 = sbr.rel (%p100) target = $region20
    $region19: #{pixel_deconv.1} parent=5 // pred_region
      // Predicated region
      $region21: #{pixel_deconv.1} parent=19 // pred_check
        %p103 = pneg %p28
      $region22: #{pixel_deconv.1} parent=19 // pred_check_branch
        %105 = sbr.rel (%p103) target = $region24
      $region23: #{pixel_deconv.1} parent=19 // pred_region
        %p106 = scmp.lt.s32.totalorder %s8, 3
        %s107 = scalar_select %p106, %s8, 3
        %s108 = smul.addr %s107, 2
        %s109 = smul.addr %s108, 2
        %s110 = scalar_lea.vmem %s0, %s109
      $region24: #{pixel_deconv.1} parent=19 // pred_fallthru
        _
    $region20: #{pixel_deconv.1} parent=5 // pred_fallthru
      _
    %p111 = scmp.le.s32.totalorder 1, %s8
    %p112 = scmp.lt.s32.totalorder %s8, 5
    %p113 = pnand %p111, %p112
    %p114 = pneg %p113
    // Predicated region
    $region25: #{pixel_deconv.1} parent=5 // pred_check
      _
    $region26: #{pixel_deconv.1} parent=5 // pred_check_branch
      %116 = sbr.rel (%p113) target = $region28
    $region27: #{pixel_deconv.1} parent=5 // pred_region
      %s117 = ssub.s32 %s8, 1
      %p118 = scmp.lt.s32.totalorder %s13, 3
      %s119 = scalar_select %p118, %s13, 3
      %s120 = smul.addr %s119, 2
      %s121 = smul.addr %s120, 2
      %s122 = scalar_lea.vmem %s0, %s121
      %p123 = pneg %p34
      %p124 = pneg %p31
      %p125 = pneg %p55
      %p126 = pneg %p52
      %p127 = pneg %p81
      %p128 = pneg %p78
      %p129 = scmp.lt.s32.totalorder %s13, 3
      %s130 = scalar_select %p129, %s13, 3
      %s131 = smul.addr %s130, 4
      %s132 = smul.addr %s131, 4
      %s133 = scalar_lea.vmem %s2, %s132
      %p134 = scmp.lt.s32.totalorder %s13, 3
      %s135 = scalar_select %p134, %s13, 3
      %s136 = smul.addr %s135, 2
      %s137 = smul.addr %s136, 2
      %s138 = scalar_lea.vmem %s0, %s137
      %p139 = scmp.lt.s32.totalorder %s13, 3
      %s140 = scalar_select %p139, %s13, 3
      %s141 = smul.addr %s140, 4
      %s142 = smul.addr %s141, 4
      %s143 = scalar_lea.vmem %s2, %s142
      %v145 = vld [vmem:[%s138] sm:$0xf]
      %v146 = vld [vmem:[%s1] sm:$0xf]
      %v147 = vld [vmem:[%s1 + $0x4] sm:$0xf]
      %s148 = scalar_lea.vmem %s1, 8
      %v149 = vld [vmem:[%s148] sm:$0xf]
      %v150 = vld [vmem:[%s148 + $0x4] sm:$0xf]
      %v153 = vunpack.c.l.b16 %v149
      %v154 = vunpack.c.l.b16 %v150
      %v155 = vpack.c.b16 %v154, %v153
      %v158 = vunpack.c.l.s4 1983009808
      %v159 = vunpack.c.0.s8 %v158
      %v160 = vlaneseq
      %v161 = vshrl.u32 %v160, 7
      %v162 = vsub.s32 %v159, %v161
      %v163 = vrot.slane %v145, %v162
      %v164 = vcombine.high %v163, %v163
      %165 = vrot.lane.b32.xlu0 %v163, 127
      %v166 = vpop.permute.xlu0 %165
      %167 = vrot.lane.b32.xlu0 %v164, 127
      %v168 = vpop.permute.xlu0 %167
      %vm169 = vcmask 1039360
      %v170 = vsel %vm169, %v166, %v168
      %vm171 = vcmask 31744
      %v173 = vsel %vm171, %v155, 0
      %vm175 = vcmask 1041408
      %v177 = vsel %vm175, %v170, 0
      %v180 = vsel %vm175, %v168, 0
      %182 = vmatprep.subr.bf16.mxu0 %v180
      %183 = vmatpush1.bf16.msra.mxu0 %v177
      %184 = vmatprep.subr.bf16.mxu0 0
      %185 = vmatpush1.bf16.msra.mxu0 0
      %186 = vmatprep.subr.bf16.mxu0 0
      %187 = vmatpush1.bf16.msra.mxu0 0
      %188 = vmatprep.subr.bf16.mxu0 0
      %189 = vmatpush1.bf16.msra.mxu0 0
      %190 = vmatprep.subr.bf16.mxu0 0
      %191 = vmatpush1.bf16.msra.mxu0 0
      %192 = vmatprep.subr.bf16.mxu0 0
      %193 = vmatpush1.bf16.msra.mxu0 0
      %194 = vmatprep.subr.bf16.mxu0 0
      %195 = vmatpush1.bf16.msra.mxu0 0
      %196 = vmatprep.subr.bf16.mxu0 0
      %197 = vmatpush1.bf16.msra.mxu0 0
      %198 = vmatprep.subr.bf16.mxu0 0
      %199 = vmatpush1.bf16.msra.mxu0 0
      %200 = vmatprep.subr.bf16.mxu0 0
      %201 = vmatpush1.bf16.msra.mxu0 0
      %202 = vmatprep.subr.bf16.mxu0 0
      %203 = vmatpush1.bf16.msra.mxu0 0
      %204 = vmatprep.subr.bf16.mxu0 0
      %205 = vmatpush1.bf16.msra.mxu0 0
      %206 = vmatprep.subr.bf16.mxu0 0
      %207 = vmatpush1.bf16.msra.mxu0 0
      %208 = vmatprep.subr.bf16.mxu0 0
      %209 = vmatpush1.bf16.msra.mxu0 0
      %210 = vmatprep.subr.bf16.mxu0 0
      %211 = vmatpush1.bf16.msra.mxu0 0
      %212 = vmatprep.subr.bf16.mxu0 0
      %213 = vmatpush1.bf16.msra.mxu0 0
      %214 = vmatprep.mubr.bf16.mxu0 0
      %215 = vmatmul.mubr.bf16.gmra.mrb[0].mxu0 %v173
      %v216 = vpop.f32.mrb[0].mxu0
      %v217 = vadd.f32 0.0, %v216
      %v218 = vpop.f32.mrb[0].mxu0
      %v219 = vadd.f32 0.0, %v218
      %v220 = vpop.f32.mrb[0].mxu0
      %v221 = vadd.f32 0.0, %v220
      %v222 = vpop.f32.mrb[0].mxu0
      %v223 = vadd.f32 0.0, %v222
      %224 = vdwg.mxu0
      %v227 = vunpack.c.l.b16 %v146
      %v228 = vunpack.c.l.b16 %v147
      %v229 = vpack.c.b16 %v228, %v227
      %v231 = vsel %vm171, %v229, 0
      %v234 = vsel %vm175, %v163, 0
      %v237 = vsel %vm175, %v164, 0
      %239 = vmatprep.subr.bf16.mxu0 %v237
      %240 = vmatpush1.bf16.msra.mxu0 %v234
      %241 = vmatprep.subr.bf16.mxu0 0
      %242 = vmatpush1.bf16.msra.mxu0 0
      %243 = vmatprep.subr.bf16.mxu0 0
      %244 = vmatpush1.bf16.msra.mxu0 0
      %245 = vmatprep.subr.bf16.mxu0 0
      %246 = vmatpush1.bf16.msra.mxu0 0
      %247 = vmatprep.subr.bf16.mxu0 0
      %248 = vmatpush1.bf16.msra.mxu0 0
      %249 = vmatprep.subr.bf16.mxu0 0
      %250 = vmatpush1.bf16.msra.mxu0 0
      %251 = vmatprep.subr.bf16.mxu0 0
      %252 = vmatpush1.bf16.msra.mxu0 0
      %253 = vmatprep.subr.bf16.mxu0 0
      %254 = vmatpush1.bf16.msra.mxu0 0
      %255 = vmatprep.subr.bf16.mxu0 0
      %256 = vmatpush1.bf16.msra.mxu0 0
      %257 = vmatprep.subr.bf16.mxu0 0
      %258 = vmatpush1.bf16.msra.mxu0 0
      %259 = vmatprep.subr.bf16.mxu0 0
      %260 = vmatpush1.bf16.msra.mxu0 0
      %261 = vmatprep.subr.bf16.mxu0 0
      %262 = vmatpush1.bf16.msra.mxu0 0
      %263 = vmatprep.subr.bf16.mxu0 0
      %264 = vmatpush1.bf16.msra.mxu0 0
      %265 = vmatprep.subr.bf16.mxu0 0
      %266 = vmatpush1.bf16.msra.mxu0 0
      %267 = vmatprep.subr.bf16.mxu0 0
      %268 = vmatpush1.bf16.msra.mxu0 0
      %269 = vmatprep.subr.bf16.mxu0 0
      %270 = vmatpush1.bf16.msra.mxu0 0
      %271 = vmatprep.mubr.bf16.mxu0 0
      %272 = vmatmul.mubr.bf16.gmra.mrb[0].mxu0 %v231
      %v273 = vpop.f32.mrb[0].mxu0
      %v274 = vadd.f32 %v217, %v273
      %v275 = vpop.f32.mrb[0].mxu0
      %v276 = vadd.f32 %v219, %v275
      %v277 = vpop.f32.mrb[0].mxu0
      %v278 = vadd.f32 %v221, %v277
      %v279 = vpop.f32.mrb[0].mxu0
      %v280 = vadd.f32 %v223, %v279
      %281 = vdwg.mxu0
      %v282 = vld [vmem:[%s138] sm:$0xf]
      %s283 = scalar_lea.vmem %s1, 16
      %v284 = vld [vmem:[%s283] sm:$0xf]
      %v285 = vld [vmem:[%s283 + $0x4] sm:$0xf]
      %v288 = vunpack.c.l.b16 %v284
      %v289 = vunpack.c.l.b16 %v285
      %v290 = vpack.c.b16 %v289, %v288
      %v293 = vunpack.c.l.s4 1983009808
      %v294 = vunpack.c.0.s8 %v293
      %v295 = vlaneseq
      %v296 = vshrl.u32 %v295, 7
      %v297 = vsub.s32 %v294, %v296
      %v298 = vrot.slane %v282, %v297
      %v299 = vcombine.high %v298, %v298
      %300 = vrot.lane.b32.xlu0 %v298, 126
      %v301 = vpop.permute.xlu0 %300
      %302 = vrot.lane.b32.xlu0 %v299, 126
      %v303 = vpop.permute.xlu0 %302
      %vm304 = vcmask 1031168
      %v305 = vsel %vm304, %v301, %v303
      %v307 = vsel %vm171, %v290, 0
      %v310 = vsel %vm175, %v305, 0
      %v313 = vsel %vm175, %v303, 0
      %315 = vmatprep.subr.bf16.mxu0 %v313
      %316 = vmatpush1.bf16.msra.mxu0 %v310
      %317 = vmatprep.subr.bf16.mxu0 0
      %318 = vmatpush1.bf16.msra.mxu0 0
      %319 = vmatprep.subr.bf16.mxu0 0
      %320 = vmatpush1.bf16.msra.mxu0 0
      %321 = vmatprep.subr.bf16.mxu0 0
      %322 = vmatpush1.bf16.msra.mxu0 0
      %323 = vmatprep.subr.bf16.mxu0 0
      %324 = vmatpush1.bf16.msra.mxu0 0
      %325 = vmatprep.subr.bf16.mxu0 0
      %326 = vmatpush1.bf16.msra.mxu0 0
      %327 = vmatprep.subr.bf16.mxu0 0
      %328 = vmatpush1.bf16.msra.mxu0 0
      %329 = vmatprep.subr.bf16.mxu0 0
      %330 = vmatpush1.bf16.msra.mxu0 0
      %331 = vmatprep.subr.bf16.mxu0 0
      %332 = vmatpush1.bf16.msra.mxu0 0
      %333 = vmatprep.subr.bf16.mxu0 0
      %334 = vmatpush1.bf16.msra.mxu0 0
      %335 = vmatprep.subr.bf16.mxu0 0
      %336 = vmatpush1.bf16.msra.mxu0 0
      %337 = vmatprep.subr.bf16.mxu0 0
      %338 = vmatpush1.bf16.msra.mxu0 0
      %339 = vmatprep.subr.bf16.mxu0 0
      %340 = vmatpush1.bf16.msra.mxu0 0
      %341 = vmatprep.subr.bf16.mxu0 0
      %342 = vmatpush1.bf16.msra.mxu0 0
      %343 = vmatprep.subr.bf16.mxu0 0
      %344 = vmatpush1.bf16.msra.mxu0 0
      %345 = vmatprep.subr.bf16.mxu0 0
      %346 = vmatpush1.bf16.msra.mxu0 0
      %347 = vmatprep.mubr.bf16.mxu0 0
      %348 = vmatmul.mubr.bf16.gmra.mrb[0].mxu0 %v307
      %v349 = vpop.f32.mrb[0].mxu0
      %v350 = vadd.f32 0.0, %v349
      %v351 = vpop.f32.mrb[0].mxu0
      %v352 = vadd.f32 0.0, %v351
      %v353 = vpop.f32.mrb[0].mxu0
      %v354 = vadd.f32 0.0, %v353
      %v355 = vpop.f32.mrb[0].mxu0
      %v356 = vadd.f32 0.0, %v355
      %357 = vdwg.mxu0
      %v358 = vadd.f32 %v274, %v350
      %v359 = vadd.f32 %v276, %v352
      %v360 = vadd.f32 %v278, %v354
      %v361 = vadd.f32 %v280, %v356
      %v362 = vld [vmem:[%s138] sm:$0xf]
      %s363 = scalar_lea.vmem %s1, 24
      %v364 = vld [vmem:[%s363] sm:$0xf]
      %v365 = vld [vmem:[%s363 + $0x4] sm:$0xf]
      %v368 = vunpack.c.l.b16 %v364
      %v369 = vunpack.c.l.b16 %v365
      %v370 = vpack.c.b16 %v369, %v368
      %v373 = vunpack.c.l.s4 1983009808
      %v374 = vunpack.c.0.s8 %v373
      %v375 = vlaneseq
      %v376 = vshrl.u32 %v375, 7
      %v377 = vsub.s32 %v374, %v376
      %v378 = vrot.slane %v362, %v377
      %v379 = vcombine.high %v378, %v378
      %380 = vrot.lane.b32.xlu0 %v378, 110
      %v381 = vpop.permute.xlu0 %380
      %382 = vrot.lane.b32.xlu0 %v379, 110
      %v383 = vpop.permute.xlu0 %382
      %vm384 = vcmask 900096
      %v385 = vsel %vm384, %v381, %v383
      %v387 = vsel %vm171, %v370, 0
      %v390 = vsel %vm175, %v385, 0
      %v393 = vsel %vm175, %v383, 0
      %395 = vmatprep.subr.bf16.mxu0 %v393
      %396 = vmatpush1.bf16.msra.mxu0 %v390
      %397 = vmatprep.subr.bf16.mxu0 0
      %398 = vmatpush1.bf16.msra.mxu0 0
      %399 = vmatprep.subr.bf16.mxu0 0
      %400 = vmatpush1.bf16.msra.mxu0 0
      %401 = vmatprep.subr.bf16.mxu0 0
      %402 = vmatpush1.bf16.msra.mxu0 0
      %403 = vmatprep.subr.bf16.mxu0 0
      %404 = vmatpush1.bf16.msra.mxu0 0
      %405 = vmatprep.subr.bf16.mxu0 0
      %406 = vmatpush1.bf16.msra.mxu0 0
      %407 = vmatprep.subr.bf16.mxu0 0
      %408 = vmatpush1.bf16.msra.mxu0 0
      %409 = vmatprep.subr.bf16.mxu0 0
      %410 = vmatpush1.bf16.msra.mxu0 0
      %411 = vmatprep.subr.bf16.mxu0 0
      %412 = vmatpush1.bf16.msra.mxu0 0
      %413 = vmatprep.subr.bf16.mxu0 0
      %414 = vmatpush1.bf16.msra.mxu0 0
      %415 = vmatprep.subr.bf16.mxu0 0
      %416 = vmatpush1.bf16.msra.mxu0 0
      %417 = vmatprep.subr.bf16.mxu0 0
      %418 = vmatpush1.bf16.msra.mxu0 0
      %419 = vmatprep.subr.bf16.mxu0 0
      %420 = vmatpush1.bf16.msra.mxu0 0
      %421 = vmatprep.subr.bf16.mxu0 0
      %422 = vmatpush1.bf16.msra.mxu0 0
      %423 = vmatprep.subr.bf16.mxu0 0
      %424 = vmatpush1.bf16.msra.mxu0 0
      %425 = vmatprep.subr.bf16.mxu0 0
      %426 = vmatpush1.bf16.msra.mxu0 0
      %427 = vmatprep.mubr.bf16.mxu0 0
      %428 = vmatmul.mubr.bf16.gmra.mrb[0].mxu0 %v387
      %v429 = vpop.f32.mrb[0].mxu0
      %v430 = vadd.f32 0.0, %v429
      %v431 = vpop.f32.mrb[0].mxu0
      %v432 = vadd.f32 0.0, %v431
      %v433 = vpop.f32.mrb[0].mxu0
      %v434 = vadd.f32 0.0, %v433
      %v435 = vpop.f32.mrb[0].mxu0
      %v436 = vadd.f32 0.0, %v435
      %437 = vdwg.mxu0
      %v438 = vadd.f32 %v358, %v430
      %v439 = vadd.f32 %v359, %v432
      %v440 = vadd.f32 %v360, %v434
      %v441 = vadd.f32 %v361, %v436
      %v442 = vld [vmem:[%s138] sm:$0xf]
      %s443 = scalar_lea.vmem %s1, 32
      %v444 = vld [vmem:[%s443] sm:$0xf]
      %v445 = vld [vmem:[%s443 + $0x4] sm:$0xf]
      %v448 = vunpack.c.l.b16 %v444
      %v449 = vunpack.c.l.b16 %v445
      %v450 = vpack.c.b16 %v449, %v448
      %v453 = vunpack.c.l.s4 1983009808
      %v454 = vunpack.c.0.s8 %v453
      %v455 = vlaneseq
      %v456 = vshrl.u32 %v455, 7
      %v457 = vsub.s32 %v454, %v456
      %v458 = vrot.slane %v442, %v457
      %v459 = vcombine.high %v458, %v458
      %460 = vrot.lane.b32.xlu0 %v458, 109
      %v461 = vpop.permute.xlu0 %460
      %462 = vrot.lane.b32.xlu0 %v459, 109
      %v463 = vpop.permute.xlu0 %462
      %vm464 = vcmask 891904
      %v465 = vsel %vm464, %v461, %v463
      %v467 = vsel %vm171, %v450, 0
      %v470 = vsel %vm175, %v465, 0
      %v473 = vsel %vm175, %v463, 0
      %475 = vmatprep.subr.bf16.mxu0 %v473
      %476 = vmatpush1.bf16.msra.mxu0 %v470
      %477 = vmatprep.subr.bf16.mxu0 0
      %478 = vmatpush1.bf16.msra.mxu0 0
      %479 = vmatprep.subr.bf16.mxu0 0
      %480 = vmatpush1.bf16.msra.mxu0 0
      %481 = vmatprep.subr.bf16.mxu0 0
      %482 = vmatpush1.bf16.msra.mxu0 0
      %483 = vmatprep.subr.bf16.mxu0 0
      %484 = vmatpush1.bf16.msra.mxu0 0
      %485 = vmatprep.subr.bf16.mxu0 0
      %486 = vmatpush1.bf16.msra.mxu0 0
      %487 = vmatprep.subr.bf16.mxu0 0
      %488 = vmatpush1.bf16.msra.mxu0 0
      %489 = vmatprep.subr.bf16.mxu0 0
      %490 = vmatpush1.bf16.msra.mxu0 0
      %491 = vmatprep.subr.bf16.mxu0 0
      %492 = vmatpush1.bf16.msra.mxu0 0
      %493 = vmatprep.subr.bf16.mxu0 0
      %494 = vmatpush1.bf16.msra.mxu0 0
      %495 = vmatprep.subr.bf16.mxu0 0
      %496 = vmatpush1.bf16.msra.mxu0 0
      %497 = vmatprep.subr.bf16.mxu0 0
      %498 = vmatpush1.bf16.msra.mxu0 0
      %499 = vmatprep.subr.bf16.mxu0 0
      %500 = vmatpush1.bf16.msra.mxu0 0
      %501 = vmatprep.subr.bf16.mxu0 0
      %502 = vmatpush1.bf16.msra.mxu0 0
      %503 = vmatprep.subr.bf16.mxu0 0
      %504 = vmatpush1.bf16.msra.mxu0 0
      %505 = vmatprep.subr.bf16.mxu0 0
      %506 = vmatpush1.bf16.msra.mxu0 0
      %507 = vmatprep.mubr.bf16.mxu0 0
      %508 = vmatmul.mubr.bf16.gmra.mrb[0].mxu0 %v467
      %v509 = vpop.f32.mrb[0].mxu0
      %v510 = vadd.f32 0.0, %v509
      %v511 = vpop.f32.mrb[0].mxu0
      %v512 = vadd.f32 0.0, %v511
      %v513 = vpop.f32.mrb[0].mxu0
      %v514 = vadd.f32 0.0, %v513
      %v515 = vpop.f32.mrb[0].mxu0
      %v516 = vadd.f32 0.0, %v515
      %517 = vdwg.mxu0
      %v518 = vadd.f32 %v438, %v510
      %v519 = vadd.f32 %v439, %v512
      %v520 = vadd.f32 %v440, %v514
      %v521 = vadd.f32 %v441, %v516
      %v522 = vld [vmem:[%s138] sm:$0xf]
      %s523 = scalar_lea.vmem %s1, 40
      %v524 = vld [vmem:[%s523] sm:$0xf]
      %v525 = vld [vmem:[%s523 + $0x4] sm:$0xf]
      %v528 = vunpack.c.l.b16 %v524
      %v529 = vunpack.c.l.b16 %v525
      %v530 = vpack.c.b16 %v529, %v528
      %v533 = vunpack.c.l.s4 1983009808
      %v534 = vunpack.c.0.s8 %v533
      %v535 = vlaneseq
      %v536 = vshrl.u32 %v535, 7
      %v537 = vsub.s32 %v534, %v536
      %v538 = vrot.slane %v522, %v537
      %v539 = vcombine.high %v538, %v538
      %540 = vrot.lane.b32.xlu0 %v538, 108
      %v541 = vpop.permute.xlu0 %540
      %542 = vrot.lane.b32.xlu0 %v539, 108
      %v543 = vpop.permute.xlu0 %542
      %vm544 = vcmask 883712
      %v545 = vsel %vm544, %v541, %v543
      %v547 = vsel %vm171, %v530, 0
      %v550 = vsel %vm175, %v545, 0
      %v553 = vsel %vm175, %v543, 0
      %555 = vmatprep.subr.bf16.mxu0 %v553
      %556 = vmatpush1.bf16.msra.mxu0 %v550
      %557 = vmatprep.subr.bf16.mxu0 0
      %558 = vmatpush1.bf16.msra.mxu0 0
      %559 = vmatprep.subr.bf16.mxu0 0
      %560 = vmatpush1.bf16.msra.mxu0 0
      %561 = vmatprep.subr.bf16.mxu0 0
      %562 = vmatpush1.bf16.msra.mxu0 0
      %563 = vmatprep.subr.bf16.mxu0 0
      %564 = vmatpush1.bf16.msra.mxu0 0
      %565 = vmatprep.subr.bf16.mxu0 0
      %566 = vmatpush1.bf16.msra.mxu0 0
      %567 = vmatprep.subr.bf16.mxu0 0
      %568 = vmatpush1.bf16.msra.mxu0 0
      %569 = vmatprep.subr.bf16.mxu0 0
      %570 = vmatpush1.bf16.msra.mxu0 0
      %571 = vmatprep.subr.bf16.mxu0 0
      %572 = vmatpush1.bf16.msra.mxu0 0
      %573 = vmatprep.subr.bf16.mxu0 0
      %574 = vmatpush1.bf16.msra.mxu0 0
      %575 = vmatprep.subr.bf16.mxu0 0
      %576 = vmatpush1.bf16.msra.mxu0 0
      %577 = vmatprep.subr.bf16.mxu0 0
      %578 = vmatpush1.bf16.msra.mxu0 0
      %579 = vmatprep.subr.bf16.mxu0 0
      %580 = vmatpush1.bf16.msra.mxu0 0
      %581 = vmatprep.subr.bf16.mxu0 0
      %582 = vmatpush1.bf16.msra.mxu0 0
      %583 = vmatprep.subr.bf16.mxu0 0
      %584 = vmatpush1.bf16.msra.mxu0 0
      %585 = vmatprep.subr.bf16.mxu0 0
      %586 = vmatpush1.bf16.msra.mxu0 0
      %587 = vmatprep.mubr.bf16.mxu0 0
      %588 = vmatmul.mubr.bf16.gmra.mrb[0].mxu0 %v547
      %v589 = vpop.f32.mrb[0].mxu0
      %v590 = vadd.f32 0.0, %v589
      %v591 = vpop.f32.mrb[0].mxu0
      %v592 = vadd.f32 0.0, %v591
      %v593 = vpop.f32.mrb[0].mxu0
      %v594 = vadd.f32 0.0, %v593
      %v595 = vpop.f32.mrb[0].mxu0
      %v596 = vadd.f32 0.0, %v595
      %597 = vdwg.mxu0
      %v598 = vadd.f32 %v518, %v590
      %v599 = vadd.f32 %v519, %v592
      %v600 = vadd.f32 %v520, %v594
      %v601 = vadd.f32 %v521, %v596
      %v602 = vld [vmem:[%s138] sm:$0xf]
      %s603 = scalar_lea.vmem %s1, 48
      %v604 = vld [vmem:[%s603] sm:$0xf]
      %v605 = vld [vmem:[%s603 + $0x4] sm:$0xf]
      %v608 = vunpack.c.l.b16 %v604
      %v609 = vunpack.c.l.b16 %v605
      %v610 = vpack.c.b16 %v609, %v608
      %v613 = vunpack.c.l.s4 1983009808
      %v614 = vunpack.c.0.s8 %v613
      %v615 = vlaneseq
      %v616 = vshrl.u32 %v615, 7
      %v617 = vsub.s32 %v614, %v616
      %v618 = vrot.slane %v602, %v617
      %v619 = vcombine.high %v618, %v618
      %620 = vrot.lane.b32.xlu0 %v618, 92
      %v621 = vpop.permute.xlu0 %620
      %622 = vrot.lane.b32.xlu0 %v619, 92
      %v623 = vpop.permute.xlu0 %622
      %vm624 = vcmask 752640
      %v625 = vsel %vm624, %v621, %v623
      %v627 = vsel %vm171, %v610, 0
      %v630 = vsel %vm175, %v625, 0
      %v633 = vsel %vm175, %v623, 0
      %635 = vmatprep.subr.bf16.mxu0 %v633
      %636 = vmatpush1.bf16.msra.mxu0 %v630
      %637 = vmatprep.subr.bf16.mxu0 0
      %638 = vmatpush1.bf16.msra.mxu0 0
      %639 = vmatprep.subr.bf16.mxu0 0
      %640 = vmatpush1.bf16.msra.mxu0 0
      %641 = vmatprep.subr.bf16.mxu0 0
      %642 = vmatpush1.bf16.msra.mxu0 0
      %643 = vmatprep.subr.bf16.mxu0 0
      %644 = vmatpush1.bf16.msra.mxu0 0
      %645 = vmatprep.subr.bf16.mxu0 0
      %646 = vmatpush1.bf16.msra.mxu0 0
      %647 = vmatprep.subr.bf16.mxu0 0
      %648 = vmatpush1.bf16.msra.mxu0 0
      %649 = vmatprep.subr.bf16.mxu0 0
      %650 = vmatpush1.bf16.msra.mxu0 0
      %651 = vmatprep.subr.bf16.mxu0 0
      %652 = vmatpush1.bf16.msra.mxu0 0
      %653 = vmatprep.subr.bf16.mxu0 0
      %654 = vmatpush1.bf16.msra.mxu0 0
      %655 = vmatprep.subr.bf16.mxu0 0
      %656 = vmatpush1.bf16.msra.mxu0 0
      %657 = vmatprep.subr.bf16.mxu0 0
      %658 = vmatpush1.bf16.msra.mxu0 0
      %659 = vmatprep.subr.bf16.mxu0 0
      %660 = vmatpush1.bf16.msra.mxu0 0
      %661 = vmatprep.subr.bf16.mxu0 0
      %662 = vmatpush1.bf16.msra.mxu0 0
      %663 = vmatprep.subr.bf16.mxu0 0
      %664 = vmatpush1.bf16.msra.mxu0 0
      %665 = vmatprep.subr.bf16.mxu0 0
      %666 = vmatpush1.bf16.msra.mxu0 0
      %667 = vmatprep.mubr.bf16.mxu0 0
      %668 = vmatmul.mubr.bf16.gmra.mrb[0].mxu0 %v627
      %v669 = vpop.f32.mrb[0].mxu0
      %v670 = vadd.f32 0.0, %v669
      %v671 = vpop.f32.mrb[0].mxu0
      %v672 = vadd.f32 0.0, %v671
      %v673 = vpop.f32.mrb[0].mxu0
      %v674 = vadd.f32 0.0, %v673
      %v675 = vpop.f32.mrb[0].mxu0
      %v676 = vadd.f32 0.0, %v675
      %677 = vdwg.mxu0
      %v678 = vadd.f32 %v598, %v670
      %v679 = vadd.f32 %v599, %v672
      %v680 = vadd.f32 %v600, %v674
      %v681 = vadd.f32 %v601, %v676
      %v682 = vld [vmem:[%s138] sm:$0xf]
      %s683 = scalar_lea.vmem %s1, 56
      %v684 = vld [vmem:[%s683] sm:$0xf]
      %v685 = vld [vmem:[%s683 + $0x4] sm:$0xf]
      %v688 = vunpack.c.l.b16 %v684
      %v689 = vunpack.c.l.b16 %v685
      %v690 = vpack.c.b16 %v689, %v688
      %v693 = vunpack.c.l.s4 1983009808
      %v694 = vunpack.c.0.s8 %v693
      %v695 = vlaneseq
      %v696 = vshrl.u32 %v695, 7
      %v697 = vsub.s32 %v694, %v696
      %v698 = vrot.slane %v682, %v697
      %v699 = vcombine.high %v698, %v698
      %700 = vrot.lane.b32.xlu0 %v698, 91
      %v701 = vpop.permute.xlu0 %700
      %702 = vrot.lane.b32.xlu0 %v699, 91
      %v703 = vpop.permute.xlu0 %702
      %vm704 = vcmask 744448
      %v705 = vsel %vm704, %v701, %v703
      %v707 = vsel %vm171, %v690, 0
      %v710 = vsel %vm175, %v705, 0
      %v713 = vsel %vm175, %v703, 0
      %715 = vmatprep.subr.bf16.mxu0 %v713
      %716 = vmatpush1.bf16.msra.mxu0 %v710
      %717 = vmatprep.subr.bf16.mxu0 0
      %718 = vmatpush1.bf16.msra.mxu0 0
      %719 = vmatprep.subr.bf16.mxu0 0
      %720 = vmatpush1.bf16.msra.mxu0 0
      %721 = vmatprep.subr.bf16.mxu0 0
      %722 = vmatpush1.bf16.msra.mxu0 0
      %723 = vmatprep.subr.bf16.mxu0 0
      %724 = vmatpush1.bf16.msra.mxu0 0
      %725 = vmatprep.subr.bf16.mxu0 0
      %726 = vmatpush1.bf16.msra.mxu0 0
      %727 = vmatprep.subr.bf16.mxu0 0
      %728 = vmatpush1.bf16.msra.mxu0 0
      %729 = vmatprep.subr.bf16.mxu0 0
      %730 = vmatpush1.bf16.msra.mxu0 0
      %731 = vmatprep.subr.bf16.mxu0 0
      %732 = vmatpush1.bf16.msra.mxu0 0
      %733 = vmatprep.subr.bf16.mxu0 0
      %734 = vmatpush1.bf16.msra.mxu0 0
      %735 = vmatprep.subr.bf16.mxu0 0
      %736 = vmatpush1.bf16.msra.mxu0 0
      %737 = vmatprep.subr.bf16.mxu0 0
      %738 = vmatpush1.bf16.msra.mxu0 0
      %739 = vmatprep.subr.bf16.mxu0 0
      %740 = vmatpush1.bf16.msra.mxu0 0
      %741 = vmatprep.subr.bf16.mxu0 0
      %742 = vmatpush1.bf16.msra.mxu0 0
      %743 = vmatprep.subr.bf16.mxu0 0
      %744 = vmatpush1.bf16.msra.mxu0 0
      %745 = vmatprep.subr.bf16.mxu0 0
      %746 = vmatpush1.bf16.msra.mxu0 0
      %747 = vmatprep.mubr.bf16.mxu0 0
      %748 = vmatmul.mubr.bf16.gmra.mrb[0].mxu0 %v707
      %v749 = vpop.f32.mrb[0].mxu0
      %v750 = vadd.f32 0.0, %v749
      %v751 = vpop.f32.mrb[0].mxu0
      %v752 = vadd.f32 0.0, %v751
      %v753 = vpop.f32.mrb[0].mxu0
      %v754 = vadd.f32 0.0, %v753
      %v755 = vpop.f32.mrb[0].mxu0
      %v756 = vadd.f32 0.0, %v755
      %757 = vdwg.mxu0
      %v758 = vadd.f32 %v678, %v750
      %v759 = vadd.f32 %v679, %v752
      %v760 = vadd.f32 %v680, %v754
      %v761 = vadd.f32 %v681, %v756
      %v762 = vld [vmem:[%s138] sm:$0xf]
      %s763 = scalar_lea.vmem %s1, 64
      %v764 = vld [vmem:[%s763] sm:$0xf]
      %v765 = vld [vmem:[%s763 + $0x4] sm:$0xf]
      %v768 = vunpack.c.l.b16 %v764
      %v769 = vunpack.c.l.b16 %v765
      %v770 = vpack.c.b16 %v769, %v768
      %v773 = vunpack.c.l.s4 1983009808
      %v774 = vunpack.c.0.s8 %v773
      %v775 = vlaneseq
      %v776 = vshrl.u32 %v775, 7
      %v777 = vsub.s32 %v774, %v776
      %v778 = vrot.slane %v762, %v777
      %v779 = vcombine.high %v778, %v778
      %780 = vrot.lane.b32.xlu0 %v778, 90
      %v781 = vpop.permute.xlu0 %780
      %782 = vrot.lane.b32.xlu0 %v779, 90
      %v783 = vpop.permute.xlu0 %782
      %vm784 = vcmask 736256
      %v785 = vsel %vm784, %v781, %v783
      %v787 = vsel %vm171, %v770, 0
      %v790 = vsel %vm175, %v785, 0
      %v793 = vsel %vm175, %v783, 0
      %795 = vmatprep.subr.bf16.mxu0 %v793
      %796 = vmatpush1.bf16.msra.mxu0 %v790
      %797 = vmatprep.subr.bf16.mxu0 0
      %798 = vmatpush1.bf16.msra.mxu0 0
      %799 = vmatprep.subr.bf16.mxu0 0
      %800 = vmatpush1.bf16.msra.mxu0 0
      %801 = vmatprep.subr.bf16.mxu0 0
      %802 = vmatpush1.bf16.msra.mxu0 0
      %803 = vmatprep.subr.bf16.mxu0 0
      %804 = vmatpush1.bf16.msra.mxu0 0
      %805 = vmatprep.subr.bf16.mxu0 0
      %806 = vmatpush1.bf16.msra.mxu0 0
      %807 = vmatprep.subr.bf16.mxu0 0
      %808 = vmatpush1.bf16.msra.mxu0 0
      %809 = vmatprep.subr.bf16.mxu0 0
      %810 = vmatpush1.bf16.msra.mxu0 0
      %811 = vmatprep.subr.bf16.mxu0 0
      %812 = vmatpush1.bf16.msra.mxu0 0
      %813 = vmatprep.subr.bf16.mxu0 0
      %814 = vmatpush1.bf16.msra.mxu0 0
      %815 = vmatprep.subr.bf16.mxu0 0
      %816 = vmatpush1.bf16.msra.mxu0 0
      %817 = vmatprep.subr.bf16.mxu0 0
      %818 = vmatpush1.bf16.msra.mxu0 0
      %819 = vmatprep.subr.bf16.mxu0 0
      %820 = vmatpush1.bf16.msra.mxu0 0
      %821 = vmatprep.subr.bf16.mxu0 0
      %822 = vmatpush1.bf16.msra.mxu0 0
      %823 = vmatprep.subr.bf16.mxu0 0
      %824 = vmatpush1.bf16.msra.mxu0 0
      %825 = vmatprep.subr.bf16.mxu0 0
      %826 = vmatpush1.bf16.msra.mxu0 0
      %827 = vmatprep.mubr.bf16.mxu0 0
      %828 = vmatmul.mubr.bf16.gmra.mrb[0].mxu0 %v787
      %v829 = vpop.f32.mrb[0].mxu0
      %v830 = vadd.f32 0.0, %v829
      %v831 = vpop.f32.mrb[0].mxu0
      %v832 = vadd.f32 0.0, %v831
      %v833 = vpop.f32.mrb[0].mxu0
      %v834 = vadd.f32 0.0, %v833
      %v835 = vpop.f32.mrb[0].mxu0
      %v836 = vadd.f32 0.0, %v835
      %837 = vdwg.mxu0
      %v838 = vadd.f32 %v758, %v830
      %v839 = vadd.f32 %v759, %v832
      %v840 = vadd.f32 %v760, %v834
      %v841 = vadd.f32 %v761, %v836
      %v842 = vpack.c.bf16 %v840, %v838
      %v843 = vpack.c.bf16 %v841, %v839
      %v846 = vunpack.c.l.b16 %v842
      %v847 = vunpack.c.l.b16 %v843
      %v848 = vunpack.c.h.b16 %v842
      %v849 = vunpack.c.h.b16 %v843
      %v850 = vpack.c.b16 %v847, %v846
      %v851 = vpack.c.b16 %v849, %v848
      %vm854 = vcmask 1043456
      %vm855 = vcmask 130052
      %vm856 = vmor %vm855, %vm854
      %857 = vst.msk [vmem:[%s143] sm:$0xff] %vm856, %v850
      %858 = vst.msk [vmem:[%s143 + $0x8] sm:$0xff] %vm856, %v851
      %p859 = scmp.lt.s32.totalorder %s13, 3
      %s860 = scalar_select %p859, %s13, 3
      %s861 = smul.addr %s860, 4
      %s862 = smul.addr %s861, 4
      %s863 = scalar_lea.vmem %s2, %s862
      // Predicated region
      $region29: #{pixel_deconv.1} parent=27 // pred_check
        %p864 = pneg %p78
      $region30: #{pixel_deconv.1} parent=27 // pred_check_branch
        %866 = sbr.rel (%p864) target = $region32
      $region31: #{pixel_deconv.1} parent=27 // pred_region
        _
      $region32: #{pixel_deconv.1} parent=27 // pred_fallthru
        _
    $region28: #{pixel_deconv.1} parent=5 // pred_fallthru
      _
    %p867 = scmp.le.s32.totalorder 2, %s8
    // Predicated region
    $region33: #{pixel_deconv.1} parent=5 // pred_check
      %p868 = pneg %p867
    $region34: #{pixel_deconv.1} parent=5 // pred_check_branch
      %870 = sbr.rel (%p868) target = $region36
    $region35: #{pixel_deconv.1} parent=5 // pred_region
      %s871 = ssub.s32 %s8, 2
      // Predicated region
      $region37: #{pixel_deconv.1} parent=35 // pred_check
        %p872 = pneg %p84
      $region38: #{pixel_deconv.1} parent=35 // pred_check_branch
        %874 = sbr.rel (%p872) target = $region40
      $region39: #{pixel_deconv.1} parent=35 // pred_region
        %p875 = scmp.lt.s32.totalorder %s14, 3
        %s876 = scalar_select %p875, %s14, 3
        %s877 = smul.addr %s876, 4
        %s878 = smul.addr %s877, 4
        %s879 = scalar_lea.vmem %s2, %s878
      $region40: #{pixel_deconv.1} parent=35 // pred_fallthru
        _
    $region36: #{pixel_deconv.1} parent=5 // pred_fallthru
      _
  $region6: #{pixel_deconv.1} parent=0 // loop_footer
    %s12 = sadd.s32 1, %s8
  $region7: #{pixel_deconv.1} parent=0 // loop_footer_branch
    %7 = sbr.rel target = $region3
  $region8: #{pixel_deconv.1} parent=0 // loop_exit
    _

</llo_original>
